<compile_context>
chip_gen: v6e
topology: v6e:2x2x1
jax: 0.10.0
libtpu: 0.0.40
codegen_flags: <defaults>
</compile_context>

<pallas_src>
import functools

import jax
import jax.numpy as jnp
from jax.experimental import pallas as pl
from jax.experimental.pallas import tpu as pltpu


def _round_up(x, m):
    return (x + m - 1) // m * m


_VMEM_LIMIT = 32 * 1024 * 1024
_ROW_TILE = 512


# ----------------------------- matmul (+bias epilogue) -----------------------------

def _matmul_kernel(a_ref, b_ref, bias_ref, o_ref, acc_ref):
    k = pl.program_id(2)

    @pl.when(k == 0)
    def _():
        acc_ref[...] = jnp.zeros_like(acc_ref)

    a = a_ref[...].astype(jnp.bfloat16)
    b = b_ref[...].astype(jnp.bfloat16)
    acc_ref[...] += jnp.dot(a, b, preferred_element_type=jnp.float32)

    @pl.when(k == pl.num_programs(2) - 1)
    def _():
        o_ref[...] = (acc_ref[...] + bias_ref[...]).astype(o_ref.dtype)


def pallas_matmul(a, b, bias=None, out_dtype=jnp.float32):
    """(M,K) @ (K,N) (+ bias) with bf16 MXU inputs and fp32 accumulation."""
    M, K = a.shape
    K2, N = b.shape
    assert K == K2
    KP = _round_up(K, 128)
    if KP <= 1024:
        TK = KP
    else:
        TK = next(t for t in (512, 384, 256, 128) if KP % t == 0)
    TM = min(256, _round_up(M, 128))
    TN = min(256, _round_up(N, 128))
    if KP != K:                                  # zero-pad only the reduction dim
        a = jnp.pad(a, ((0, 0), (0, KP - K)))
        b = jnp.pad(b, ((0, KP - K), (0, 0)))
    if bias is None:
        bias = jnp.zeros((1, N), jnp.float32)
    else:
        bias = bias.reshape(1, N).astype(jnp.float32)
    grid = (pl.cdiv(M, TM), pl.cdiv(N, TN), KP // TK)
    return pl.pallas_call(
        _matmul_kernel,
        out_shape=jax.ShapeDtypeStruct((M, N), out_dtype),
        grid=grid,
        in_specs=[pl.BlockSpec((TM, TK), lambda i, j, k: (i, k)),
                  pl.BlockSpec((TK, TN), lambda i, j, k: (k, j)),
                  pl.BlockSpec((1, TN), lambda i, j, k: (0, j))],
        out_specs=pl.BlockSpec((TM, TN), lambda i, j, k: (i, j)),
        scratch_shapes=[pltpu.VMEM((TM, TN), jnp.float32)],
        compiler_params=pltpu.CompilerParams(
            dimension_semantics=("parallel", "parallel", "arbitrary"),
            vmem_limit_bytes=_VMEM_LIMIT),
    )(a, b, bias)


# ----------------------------- element-wise kernels (row tiled) -----------------------------

def _bn_relu_kernel(x_ref, s_ref, t_ref, o_ref):
    y = x_ref[...].astype(jnp.float32) * s_ref[...] + t_ref[...]
    o_ref[...] = jnp.maximum(y, 0.0).astype(o_ref.dtype)


def pallas_bn_relu(x2d, scale, shift, out_dtype=jnp.bfloat16):
    M, C = x2d.shape
    TR = min(_ROW_TILE, _round_up(M, 8))
    row_spec = pl.BlockSpec((TR, C), lambda i: (i, 0))
    ch_spec = pl.BlockSpec((1, C), lambda i: (0, 0))
    return pl.pallas_call(
        _bn_relu_kernel,
        out_shape=jax.ShapeDtypeStruct((M, C), out_dtype),
        grid=(pl.cdiv(M, TR),),
        in_specs=[row_spec, ch_spec, ch_spec],
        out_specs=row_spec,
        compiler_params=pltpu.CompilerParams(
            dimension_semantics=("parallel",),
            vmem_limit_bytes=_VMEM_LIMIT),
    )(x2d, scale.reshape(1, C).astype(jnp.float32),
      shift.reshape(1, C).astype(jnp.float32))


def _bn_add_relu_kernel(x_ref, s1_ref, t1_ref, r_ref, s2_ref, t2_ref, o_ref):
    y = x_ref[...].astype(jnp.float32) * s1_ref[...] + t1_ref[...]
    y = y + r_ref[...].astype(jnp.float32) * s2_ref[...] + t2_ref[...]
    o_ref[...] = jnp.maximum(y, 0.0).astype(o_ref.dtype)


def pallas_bn_add_relu(x2d, s1, t1, r2d, s2, t2, out_dtype=jnp.bfloat16):
    """relu(x*s1 + t1 + r*s2 + t2): fused bn3-affine + (optional) downsample-bn
    affine + residual add + ReLU of the bottleneck tail."""
    M, C = x2d.shape
    TR = min(_ROW_TILE, _round_up(M, 8))
    row_spec = pl.BlockSpec((TR, C), lambda i: (i, 0))
    ch_spec = pl.BlockSpec((1, C), lambda i: (0, 0))
    rs = lambda v: v.reshape(1, C).astype(jnp.float32)
    return pl.pallas_call(
        _bn_add_relu_kernel,
        out_shape=jax.ShapeDtypeStruct((M, C), out_dtype),
        grid=(pl.cdiv(M, TR),),
        in_specs=[row_spec, ch_spec, ch_spec, row_spec, ch_spec, ch_spec],
        out_specs=row_spec,
        compiler_params=pltpu.CompilerParams(
            dimension_semantics=("parallel",),
            vmem_limit_bytes=_VMEM_LIMIT),
    )(x2d, rs(s1), rs(t1), r2d, rs(s2), rs(t2))


def _bn_stats_kernel(x_ref, sum_ref, sq_ref, *, m_total, row_tile):
    i = pl.program_id(0)

    @pl.when(i == 0)
    def _():
        sum_ref[...] = jnp.zeros_like(sum_ref)
        sq_ref[...] = jnp.zeros_like(sq_ref)

    x = x_ref[...].astype(jnp.float32)
    row = jax.lax.broadcasted_iota(jnp.int32, x.shape, 0) + i * row_tile
    x = jnp.where(row < m_total, x, 0.0)          # mask the partial last block
    sum_ref[...] += jnp.sum(x, axis=0, keepdims=True)
    sq_ref[...] += jnp.sum(x * x, axis=0, keepdims=True)


def pallas_bn_stats(x2d):
    """Per-channel (sum, sum of squares) of (M, C) in one HBM pass."""
    M, C = x2d.shape
    TR = min(_ROW_TILE, _round_up(M, 8))
    stat_spec = pl.BlockSpec((1, C), lambda i: (0, 0))
    return pl.pallas_call(
        functools.partial(_bn_stats_kernel, m_total=M, row_tile=TR),
        out_shape=(jax.ShapeDtypeStruct((1, C), jnp.float32),
                   jax.ShapeDtypeStruct((1, C), jnp.float32)),
        grid=(pl.cdiv(M, TR),),
        in_specs=[pl.BlockSpec((TR, C), lambda i: (i, 0))],
        out_specs=[stat_spec, stat_spec],
        compiler_params=pltpu.CompilerParams(
            dimension_semantics=("arbitrary",),
            vmem_limit_bytes=_VMEM_LIMIT),
    )(x2d)


# ----------------------------- attention core -----------------------------

def _attn_core_kernel(q_ref, k_ref, v_ref, o_ref, *, seq_len):
    q = q_ref[...].astype(jnp.bfloat16)                       # (BT, Lp, Dp)
    k = k_ref[...].astype(jnp.bfloat16)
    s = jnp.einsum('bqd,bkd->bqk', q, k,
                   preferred_element_type=jnp.float32)        # logits kept in f32
    key_idx = jax.lax.broadcasted_iota(jnp.int32, s.shape, 2)
    s = jnp.where(key_idx < seq_len, s, -1e30)                # mask padded keys
    m = jnp.max(s, axis=-1, keepdims=True)
    p = jnp.exp(s - m)
    p = p * pl.reciprocal(jnp.sum(p, axis=-1, keepdims=True), approx=True)
    o_ref[...] = jnp.einsum('bqk,bkd->bqd', p.astype(jnp.bfloat16),
                            v_ref[...].astype(jnp.bfloat16),
                            preferred_element_type=jnp.float32)


def pallas_attention_core(q, k, v):
    """softmax(q k^T) v, batched over (batch*head); q,k,v: (BH, L, Dh) f32."""
    BH, L, Dh = q.shape
    BT = BH if BH <= 8 else 8
    BHp = _round_up(BH, BT)
    Lp, Dp = _round_up(L, 8), _round_up(Dh, 128)
    # TODO(synk): Dh=64 heads could be packed 2-per-lane-tile to avoid padding Dh to 128.
    pad = lambda t: jnp.pad(t, ((0, BHp - BH), (0, Lp - L), (0, Dp - Dh)))
    spec = pl.BlockSpec((BT, Lp, Dp), lambda b: (b, 0, 0))
    out = pl.pallas_call(
        functools.partial(_attn_core_kernel, seq_len=L),
        out_shape=jax.ShapeDtypeStruct((BHp, Lp, Dp), jnp.float32),
        grid=(BHp // BT,),
        in_specs=[spec, spec, spec],
        out_specs=spec,
        compiler_params=pltpu.CompilerParams(
            dimension_semantics=("parallel",),
            vmem_limit_bytes=_VMEM_LIMIT),
    )(pad(q), pad(k), pad(v))
    return out[:BH, :L, :Dh]


# ----------------------------- model building blocks -----------------------------

def conv2d(x, w, stride=1, padding=0, out_dtype=jnp.bfloat16):
    """x: NHWC (bf16), w: (Cout, Cin, kh, kw) f32.  im2col + Pallas matmul."""
    N, H, W, Cin = x.shape
    Cout, Cin2, kh, kw = w.shape
    assert Cin == Cin2
    Ho = (H + 2 * padding - kh) // stride + 1
    Wo = (W + 2 * padding - kw) // stride + 1
    K = kh * kw * Cin
    w_mat = jnp.transpose(w, (2, 3, 1, 0)).reshape(K, Cout).astype(jnp.bfloat16)
    if kh == 1 and kw == 1 and stride == 1 and padding == 0:
        patches = x.reshape(N * H * W, Cin)       # pure reshape, no materialization
    else:
        # TODO(synk): 3x3 convs still materialize im2col patches in HBM (bf16);
        # a fully fused conv (kh*kw taps folded into the matmul K grid) would avoid it.
        xp = jnp.pad(x, ((0, 0), (padding, padding), (padding, padding), (0, 0)))
        cols = []
        for di in range(kh):
            for dj in range(kw):
                cols.append(xp[:, di:di + (Ho - 1) * stride + 1:stride,
                                  dj:dj + (Wo - 1) * stride + 1:stride, :])
        KP = _round_up(K, 128)
        if KP != K:                               # pad K once, inside the concat
            cols.append(jnp.zeros((N, Ho, Wo, KP - K), x.dtype))
            w_mat = jnp.pad(w_mat, ((0, KP - K), (0, 0)))
        patches = jnp.concatenate(cols, axis=-1).reshape(N * Ho * Wo, -1)
    out = pallas_matmul(patches, w_mat, out_dtype=out_dtype)
    return out.reshape(N, Ho, Wo, Cout)


def bn_scale_shift(x2d, gamma, beta, eps=1e-5):
    """Training-mode BN (batch stats, biased variance) -> per-channel scale/shift."""
    # TODO(synk): the affine cannot be fused into the conv epilogue because the
    # batch statistics depend on the full conv output (training-mode BN).
    M, _ = x2d.shape
    s, sq = pallas_bn_stats(x2d)
    mean = s / M
    var = jnp.maximum(sq / M - mean * mean, 0.0)
    scale = gamma / jnp.sqrt(var + eps)
    shift = beta - mean * scale
    return scale, shift


def batchnorm_relu(x, gamma, beta):
    N, H, W, C = x.shape
    x2 = x.reshape(N * H * W, C)
    scale, shift = bn_scale_shift(x2, gamma, beta)
    return pallas_bn_relu(x2, scale, shift).reshape(N, H, W, C)


def avgpool2d(x, s):
    if s == 1:
        return x
    N, H, W, C = x.shape
    return (x.reshape(N, H // s, s, W // s, s, C)
             .astype(jnp.float32).mean(axis=(2, 4)).astype(x.dtype))


def bottleneck_forward(x, p):
    stride = p['stride']
    out = conv2d(x, p['conv1_w'])
    out = batchnorm_relu(out, p['bn1_g'], p['bn1_b'])
    out = conv2d(out, p['conv2_w'], padding=1)
    out = batchnorm_relu(out, p['bn2_g'], p['bn2_b'])
    out = avgpool2d(out, stride)
    out = conv2d(out, p['conv3_w'])
    N, H, W, C = out.shape
    out2 = out.reshape(N * H * W, C)
    s1, t1 = bn_scale_shift(out2, p['bn3_g'], p['bn3_b'])
    if 'down_conv_w' in p:
        idn = avgpool2d(x, stride)
        idn = conv2d(idn, p['down_conv_w'])
        idn2 = idn.reshape(N * H * W, C)
        s2, t2 = bn_scale_shift(idn2, p['down_bn_g'], p['down_bn_b'])
    else:
        idn2 = x.reshape(N * H * W, C)
        s2 = jnp.ones((C,), jnp.float32)
        t2 = jnp.zeros((C,), jnp.float32)
    y = pallas_bn_add_relu(out2, s1, t1, idn2, s2, t2)
    return y.reshape(N, H, W, C)


def attnpool_forward(x, p, num_heads):
    N, H, W, C = x.shape
    xf = x.reshape(N, H * W, C).transpose(1, 0, 2).astype(jnp.float32)   # (HW, N, C)
    xf = jnp.concatenate([xf.mean(axis=0, keepdims=True), xf], axis=0)   # (L, N, C)
    xf = xf + p['pos_emb'][:, None, :]
    L, E = xf.shape[0], C
    Dh = E // num_heads
    x2 = xf.reshape(L * N, E).astype(jnp.bfloat16)
    # fused q/k/v projection, 1/sqrt(Dh) scale baked into the q weight & bias
    sc = Dh ** -0.5
    w_qkv = jnp.concatenate([p['q_w'].T * sc, p['k_w'].T, p['v_w'].T], axis=1)
    b_qkv = jnp.concatenate([p['q_b'] * sc, p['k_b'], p['v_b']])
    qkv = pallas_matmul(x2, w_qkv.astype(jnp.bfloat16), bias=b_qkv,
                        out_dtype=jnp.float32)                           # (L*N, 3E)
    q, k, v = qkv[:, :E], qkv[:, E:2 * E], qkv[:, 2 * E:]

    def to_heads(t):
        return (t.reshape(L, N, num_heads, Dh)
                 .transpose(1, 2, 0, 3)
                 .reshape(N * num_heads, L, Dh))

    oh = pallas_attention_core(to_heads(q), to_heads(k), to_heads(v))
    o = (oh.reshape(N, num_heads, L, Dh)
           .transpose(2, 0, 1, 3)
           .reshape(L * N, E))
    o = pallas_matmul(o, p['c_w'].T.astype(jnp.bfloat16), bias=p['c_b'],
                      out_dtype=jnp.float32)
    return o.reshape(L, N, -1)[0]                                        # (N, enc_dim)


def modified_resnet_forward(x_nchw, params, heads):
    x = jnp.transpose(x_nchw.astype(jnp.float32), (0, 2, 3, 1)).astype(jnp.bfloat16)
    # stem
    x = conv2d(x, params['conv1_w'], stride=2, padding=1)
    x = batchnorm_relu(x, params['bn1_g'], params['bn1_b'])
    x = conv2d(x, params['conv2_w'], padding=1)
    x = batchnorm_relu(x, params['bn2_g'], params['bn2_b'])
    x = conv2d(x, params['conv3_w'], padding=1)
    x = batchnorm_relu(x, params['bn3_g'], params['bn3_b'])
    x = avgpool2d(x, 2)
    for layer in ('layer1', 'layer2', 'layer3', 'layer4'):
        for blk in params[layer]:
            x = bottleneck_forward(x, blk)
    return attnpool_forward(x, params['attnpool'], heads)


def finetuned_model_forward(image_nchw, params, heads):
    """FinetunedModel.forward: clip.encode_image (ModifiedResNet -> @ visual.proj)
    followed by the linear classification head."""
    feats = modified_resnet_forward(image_nchw, params['resnet'], heads)  # (N, enc_dim)
    emb = pallas_matmul(feats, params['visual_proj'], out_dtype=jnp.float32)
    logits = pallas_matmul(emb, params['head_w'].T, bias=params['head_b'],
                           out_dtype=jnp.float32)
    return logits


# ----------------------------- deterministic parameter init -----------------------------

def init_params(key, layers, resnet_output_dim, heads, input_resolution, width,
                clip_embed_dim, nclass):
    keys = iter(jax.random.split(key, 512))

    def nrm(shape, scale=0.05):
        return scale * jax.random.normal(next(keys), shape, jnp.float32)

    def bn(c):
        return (1.0 + 0.1 * jax.random.normal(next(keys), (c,), jnp.float32),
                0.1 * jax.random.normal(next(keys), (c,), jnp.float32))

    rp = {}
    rp['conv1_w'] = nrm((width // 2, 3, 3, 3))
    rp['bn1_g'], rp['bn1_b'] = bn(width // 2)
    rp['conv2_w'] = nrm((width // 2, width // 2, 3, 3))
    rp['bn2_g'], rp['bn2_b'] = bn(width // 2)
    rp['conv3_w'] = nrm((width, width // 2, 3, 3))
    rp['bn3_g'], rp['bn3_b'] = bn(width)

    inplanes = width

    def make_layer(planes, blocks, stride):
        nonlocal inplanes
        blks = []
        for b in range(blocks):
            st = stride if b == 0 else 1
            p = {'stride': st}
            p['conv1_w'] = nrm((planes, inplanes, 1, 1))
            p['bn1_g'], p['bn1_b'] = bn(planes)
            p['conv2_w'] = nrm((planes, planes, 3, 3))
            p['bn2_g'], p['bn2_b'] = bn(planes)
            p['conv3_w'] = nrm((planes * 4, planes, 1, 1))
            p['bn3_g'], p['bn3_b'] = bn(planes * 4)
            if st > 1 or inplanes != planes * 4:
                p['down_conv_w'] = nrm((planes * 4, inplanes, 1, 1))
                p['down_bn_g'], p['down_bn_b'] = bn(planes * 4)
            inplanes = planes * 4
            blks.append(p)
        return blks

    rp['layer1'] = make_layer(width, layers[0], 1)
    rp['layer2'] = make_layer(width * 2, layers[1], 2)
    rp['layer3'] = make_layer(width * 4, layers[2], 2)
    rp['layer4'] = make_layer(width * 8, layers[3], 2)

    embed_dim = width * 32
    spacial = input_resolution // 32
    ap = {}
    ap['pos_emb'] = (jax.random.normal(next(keys),
                                       (spacial ** 2 + 1, embed_dim), jnp.float32)
                     / embed_dim ** 0.5)
    ap['q_w'], ap['q_b'] = nrm((embed_dim, embed_dim)), nrm((embed_dim,))
    ap['k_w'], ap['k_b'] = nrm((embed_dim, embed_dim)), nrm((embed_dim,))
    ap['v_w'], ap['v_b'] = nrm((embed_dim, embed_dim)), nrm((embed_dim,))
    ap['c_w'], ap['c_b'] = nrm((resnet_output_dim, embed_dim)), nrm((resnet_output_dim,))
    rp['attnpool'] = ap

    params = {'resnet': rp}
    params['visual_proj'] = (resnet_output_dim ** -0.5) * jax.random.normal(
        next(keys), (resnet_output_dim, clip_embed_dim), jnp.float32)
    params['head_w'] = nrm((nclass, clip_embed_dim))
    params['head_b'] = nrm((nclass,))
    return params


# ----------------------------- demo -----------------------------

if __name__ == "__main__":
    # Small config: layers=(1,1,1,1), width=8 -> resnet embed_dim = 256,
    # input_resolution=32 -> final spatial 1x1, attn seq length 2.
    layers = (1, 1, 1, 1)
    resnet_output_dim = 32
    heads = 4
    input_resolution = 32
    width = 8
    clip_embed_dim = 16
    nclass = 14

    key = jax.random.PRNGKey(0)
    pkey, xkey = jax.random.split(key)
    params = init_params(pkey, layers, resnet_output_dim, heads,
                         input_resolution, width, clip_embed_dim, nclass)

    x = jax.random.normal(xkey, (2, 3, input_resolution, input_resolution),
                          jnp.float32)  # NCHW, like the PyTorch module

    out = finetuned_model_forward(x, params, heads)
    out = jax.block_until_ready(out)
    assert out.shape == (2, nclass), out.shape
    assert bool(jnp.all(jnp.isfinite(out)))
    print("KERNEL_OK")
</pallas_src>

<mosaic_0001>
module attributes {stable_mosaic.version = 11 : i64} {
  func.func @_matmul_kernel(%arg0: i32, %arg1: i32, %arg2: i32, %arg3: memref<256x128xbf16, #tpu.memory_space<vmem>>, %arg4: memref<128x128xbf16, #tpu.memory_space<vmem>>, %arg5: memref<1x128xf32, #tpu.memory_space<vmem>>, %arg6: memref<256x128xbf16, #tpu.memory_space<vmem>>, %arg7: memref<256x128xf32, #tpu.memory_space<vmem>>) attributes {dimension_semantics = [#tpu.dimension_semantics<parallel>, #tpu.dimension_semantics<parallel>, #tpu.dimension_semantics<arbitrary>], iteration_bounds = array<i64: 2, 1, 1>, scalar_prefetch = 0 : i64, scratch_operands = 1 : i64, tpu.core_type = #tpu.core_type<tc>, window_params = [{transform_indices = @transform_0, window_bounds = array<i64: 256, 128>}, {transform_indices = @transform_1, window_bounds = array<i64: 128, 128>}, {transform_indices = @transform_2, window_bounds = array<i64: 1, 128>}, {transform_indices = @transform_3, window_bounds = array<i64: 256, 128>}]} {
    %c0_i32 = arith.constant 0 : i32
    %0 = arith.cmpi eq, %arg2, %c0_i32 : i32
    %1 = arith.extui %0 : i1 to i32
    %c0_i32_0 = arith.constant 0 : i32
    %2 = arith.cmpi ne, %1, %c0_i32_0 : i32
    scf.if %2 {
      %cst_10 = arith.constant 0.000000e+00 : f32
      %12 = vector.broadcast %cst_10 : f32 to vector<256x128xf32>
      %c0_11 = arith.constant 0 : index
      %c0_12 = arith.constant 0 : index
      %13 = vector.load %arg7[%c0_11, %c0_12] : memref<256x128xf32, #tpu.memory_space<vmem>>, vector<256x128xf32>
      tpu.vector_store %arg7[%c0_11, %c0_12], %12 {strides = array<i32>} : memref<256x128xf32, #tpu.memory_space<vmem>>, vector<256x128xf32>,
    } else {
    }
    %c0 = arith.constant 0 : index
    %c0_1 = arith.constant 0 : index
    %3 = vector.load %arg3[%c0, %c0_1] : memref<256x128xbf16, #tpu.memory_space<vmem>>, vector<256x128xbf16>
    %c0_2 = arith.constant 0 : index
    %c0_3 = arith.constant 0 : index
    %4 = vector.load %arg4[%c0_2, %c0_3] : memref<128x128xbf16, #tpu.memory_space<vmem>>, vector<128x128xbf16>
    %c0_4 = arith.constant 0 : index
    %c0_5 = arith.constant 0 : index
    %5 = vector.load %arg7[%c0_4, %c0_5] : memref<256x128xf32, #tpu.memory_space<vmem>>, vector<256x128xf32>
    %cst = arith.constant dense<0.000000e+00> : vector<256x128xf32>
    %6 = tpu.matmul %3, %4, %cst {dimension_numbers = #tpu.dot_dimension_numbers<[1], [0], [0], [1], [0, 0, 1, 1], [], []>} : vector<256x128xbf16>, vector<128x128xbf16>, vector<256x128xf32> -> vector<256x128xf32>
    %7 = arith.addf %5, %6 : vector<256x128xf32>
    %c0_6 = arith.constant 0 : index
    %c0_7 = arith.constant 0 : index
    %8 = vector.load %arg7[%c0_6, %c0_7] : memref<256x128xf32, #tpu.memory_space<vmem>>, vector<256x128xf32>
    tpu.vector_store %arg7[%c0_6, %c0_7], %7 {strides = array<i32>} : memref<256x128xf32, #tpu.memory_space<vmem>>, vector<256x128xf32>,
    %c0_i32_8 = arith.constant 0 : i32
    %9 = arith.cmpi eq, %arg2, %c0_i32_8 : i32
    %10 = arith.extui %9 : i1 to i32
    %c0_i32_9 = arith.constant 0 : i32
    %11 = arith.cmpi ne, %10, %c0_i32_9 : i32
    scf.if %11 {
      %c0_10 = arith.constant 0 : index
      %c0_11 = arith.constant 0 : index
      %12 = vector.load %arg7[%c0_10, %c0_11] : memref<256x128xf32, #tpu.memory_space<vmem>>, vector<256x128xf32>
      %c0_12 = arith.constant 0 : index
      %c0_13 = arith.constant 0 : index
      %13 = vector.load %arg5[%c0_12, %c0_13] : memref<1x128xf32, #tpu.memory_space<vmem>>, vector<1x128xf32>
      %14 = vector.broadcast %13 : vector<1x128xf32> to vector<256x128xf32>
      %15 = arith.addf %12, %14 : vector<256x128xf32>
      %16 = arith.truncf %15 : vector<256x128xf32> to vector<256x128xbf16>
      %c0_14 = arith.constant 0 : index
      %c0_15 = arith.constant 0 : index
      %17 = vector.load %arg6[%c0_14, %c0_15] : memref<256x128xbf16, #tpu.memory_space<vmem>>, vector<256x128xbf16>
      tpu.vector_store %arg6[%c0_14, %c0_15], %16 {strides = array<i32>} : memref<256x128xbf16, #tpu.memory_space<vmem>>, vector<256x128xbf16>,
    } else {
    }
    return
  }
  func.func @transform_0(%arg0: i32, %arg1: i32, %arg2: i32) -> (i32, i32) {
    %c0_i32 = arith.constant 0 : i32
    return %arg0, %arg2 : i32, i32
  }
  func.func @transform_1(%arg0: i32, %arg1: i32, %arg2: i32) -> (i32, i32) {
    %c0_i32 = arith.constant 0 : i32
    return %arg2, %arg1 : i32, i32
  }
  func.func @transform_2(%arg0: i32, %arg1: i32, %arg2: i32) -> (i32, i32) {
    %c0_i32 = arith.constant 0 : i32
    %c0_i32_0 = arith.constant 0 : i32
    return %c0_i32, %arg1 : i32, i32
  }
  func.func @transform_3(%arg0: i32, %arg1: i32, %arg2: i32) -> (i32, i32) {
    %c0_i32 = arith.constant 0 : i32
    return %arg0, %arg1 : i32, i32
  }
}

</mosaic_0001>

<llo_original>
// kernel: tpu_custom_call.1
$region0: #{tpu_custom_call.1}
  #allocation0 [shape = 'u32[]', space=smem, size = 0x4, offset = 0x4, fixed_abs, tag = 'smem constant byte address 0x4 - core index']
  #allocation1 [shape = 'u32[144,128]{1,0:T(1,128)}', space=vmem, size = 0x12000, scoped, tag = 'internal scratch']
  #allocation2 [shape = 'f32[256,128]{1,0:T(8,128)}', space=vmem, size = 0x20000, scoped, tag = 'scratch operand']
  %s0 = inlined_call_operand.hbm [shape: bf16[512,128], index: 0, kind: input, shape index: {}]
  %s1 = inlined_call_operand.vmem [shape: bf16[128,4], index: 1, kind: input, shape index: {}]
  %s2 = inlined_call_operand.vmem [shape: f32[1,4], index: 2, kind: input, shape index: {}]
  %s3 = inlined_call_operand.vmem [shape: bf16[512,4], index: 3, kind: output, shape index: {}]
  %s4 = sld [smem:[#allocation0]]
  $region57: #{tpu_custom_call.1} parent=0
    _
  %s6 = ssub.s32 1, %s4
  %s7 = scalar_select 0, %s6, %s4
  $region1: #{tpu_custom_call.1} parent=0
    #allocation3 [shape = 'u8[131072]{0}', space=vmem, size = 0x20000, scoped, tag = 'input window, operand 0']
    #allocation4 [shape = 's32[2]{0}', space=sflag, size = 0x8, scoped, tag = 'scoped memory for tpu_custom_call.1']
    %8 = vsyncpa [#allocation4], 0
    %s9 = scalar_lea.sflag [#allocation4], 1
    %10 = vsyncpa %s9, 0
    loop: start=0, step=1, limit=4
    $region2: #{tpu_custom_call.1} parent=1 // loop_pre_header
      _
    $region3: #{tpu_custom_call.1} parent=1 // loop_header
      %s12 = sphi 0, %s16
      %p13 = scmp.ge.s32.totalorder %s12, 4
      %s19 = sphi 0, %s38
      %s20 = sphi 0, %s34
      %s21 = sphi 0, %s30
      %s22 = sphi 0, %s19
      %s23 = sphi 0, %s20
      %s24 = sphi 0, %s21
      %s25 = sphi 0, %s22
      %s26 = sphi 0, %s23
      %s27 = sphi 0, %s24
      %s43 = sphi 0, %s45
      %s46 = sphi 0, %s43
      %s47 = sphi 0, %s46
      %s63 = sphi 0, %s47
      %s71 = sphi 0, %s73
      %s74 = sphi 0, %s71
      %s75 = sphi 0, %s74
      %s91 = sphi 0, %s75
      %s97 = sphi 0, %s99
      %s100 = sphi 0, %s97
      %s101 = sphi 0, %s100
      %s117 = sphi 0, %s101
      %s125 = sphi 0, %s127
      %s128 = sphi 0, %s125
      %s129 = sphi 0, %s128
      %s145 = sphi 0, %s129
    $region4: #{tpu_custom_call.1} parent=1 // loop_header_branch
      %15 = sbr.rel (%p13) target = $region8
    $region5: #{tpu_custom_call.1} parent=1 // loop_body
      %s17 = ssub.s32 %s12, 1
      %s18 = ssub.s32 %s12, 2
      %s28 = sadd.s32 1, %s21
      %p29 = scmp.ge.s32.totalorder %s28, 1
      %s30 = scalar_select %p29, 0, %s28
      %s31 = sadd.s32 1, %s20
      %s32 = scalar_select %p29, %s31, %s20
      %p33 = scmp.ge.s32.totalorder %s32, 1
      %s34 = scalar_select %p33, 0, %s32
      %s35 = sadd.s32 1, %s19
      %s36 = scalar_select %p33, %s35, %s19
      %p37 = scmp.ge.s32.totalorder %s36, 2
      %s38 = scalar_select %p37, 0, %s36
      %s39 = ssub.s32 %s19, %s38
      %s40 = ssub.s32 %s21, %s30
      %s41 = sor.u32 %s39, %s40
      %p42 = scmp.eq.s32.totalorder %s41, 0
      %s44 = sadd.s32 %s43, 1
      %s45 = scalar_select %p42, %s43, %s44
      %p48 = pneg %p42
      %p49 = scmp.eq.s32.totalorder %s12, 1
      %p50 = por %p48, %p49
      %p51 = scmp.ne.s32.totalorder %s43, %s46
      %p52 = scmp.eq.s32.totalorder %s12, 0
      %p53 = por %p51, %p52
      %p54 = scmp.ne.s32.totalorder %s43, %s46
      %p55 = scmp.eq.s32.totalorder %s17, 1
      %p56 = por %p54, %p55
      %p57 = scmp.ne.s32.totalorder %s46, %s47
      %p58 = scmp.eq.s32.totalorder %s17, 0
      %p59 = por %p57, %p58
      %p60 = scmp.ne.s32.totalorder %s46, %s47
      %p61 = scmp.eq.s32.totalorder %s18, 1
      %p62 = por %p60, %p61
      %p64 = scmp.ne.s32.totalorder %s47, %s63
      %p65 = scmp.eq.s32.totalorder %s18, 0
      %p66 = por %p64, %p65
      %s67 = ssub.s32 %s21, %s30
      %s68 = ssub.s32 %s20, %s34
      %s69 = sor.u32 %s67, %s68
      %p70 = scmp.eq.s32.totalorder %s69, 0
      %s72 = sadd.s32 %s71, 1
      %s73 = scalar_select %p70, %s71, %s72
      %p76 = pneg %p70
      %p77 = scmp.eq.s32.totalorder %s12, 1
      %p78 = por %p76, %p77
      %p79 = scmp.ne.s32.totalorder %s71, %s74
      %p80 = scmp.eq.s32.totalorder %s12, 0
      %p81 = por %p79, %p80
      %p82 = scmp.ne.s32.totalorder %s71, %s74
      %p83 = scmp.eq.s32.totalorder %s17, 1
      %p84 = por %p82, %p83
      %p85 = scmp.ne.s32.totalorder %s74, %s75
      %p86 = scmp.eq.s32.totalorder %s17, 0
      %p87 = por %p85, %p86
      %p88 = scmp.ne.s32.totalorder %s74, %s75
      %p89 = scmp.eq.s32.totalorder %s18, 1
      %p90 = por %p88, %p89
      %p92 = scmp.ne.s32.totalorder %s75, %s91
      %p93 = scmp.eq.s32.totalorder %s18, 0
      %p94 = por %p92, %p93
      %s95 = ssub.s32 %s20, %s34
      %p96 = scmp.eq.s32.totalorder %s95, 0
      %s98 = sadd.s32 %s97, 1
      %s99 = scalar_select %p96, %s97, %s98
      %p102 = pneg %p96
      %p103 = scmp.eq.s32.totalorder %s12, 1
      %p104 = por %p102, %p103
      %p105 = scmp.ne.s32.totalorder %s97, %s100
      %p106 = scmp.eq.s32.totalorder %s12, 0
      %p107 = por %p105, %p106
      %p108 = scmp.ne.s32.totalorder %s97, %s100
      %p109 = scmp.eq.s32.totalorder %s17, 1
      %p110 = por %p108, %p109
      %p111 = scmp.ne.s32.totalorder %s100, %s101
      %p112 = scmp.eq.s32.totalorder %s17, 0
      %p113 = por %p111, %p112
      %p114 = scmp.ne.s32.totalorder %s100, %s101
      %p115 = scmp.eq.s32.totalorder %s18, 1
      %p116 = por %p114, %p115
      %p118 = scmp.ne.s32.totalorder %s101, %s117
      %p119 = scmp.eq.s32.totalorder %s18, 0
      %p120 = por %p118, %p119
      %s121 = ssub.s32 %s19, %s38
      %s122 = ssub.s32 %s20, %s34
      %s123 = sor.u32 %s121, %s122
      %p124 = scmp.eq.s32.totalorder %s123, 0
      %s126 = sadd.s32 %s125, 1
      %s127 = scalar_select %p124, %s125, %s126
      %p130 = pneg %p124
      %p131 = scmp.eq.s32.totalorder %s12, 1
      %p132 = por %p130, %p131
      %p133 = scmp.ne.s32.totalorder %s125, %s128
      %p134 = scmp.eq.s32.totalorder %s12, 0
      %p135 = por %p133, %p134
      %p136 = scmp.ne.s32.totalorder %s125, %s128
      %p137 = scmp.eq.s32.totalorder %s17, 1
      %p138 = por %p136, %p137
      %p139 = scmp.ne.s32.totalorder %s128, %s129
      %p140 = scmp.eq.s32.totalorder %s17, 0
      %p141 = por %p139, %p140
      %p142 = scmp.ne.s32.totalorder %s128, %s129
      %p143 = scmp.eq.s32.totalorder %s18, 1
      %p144 = por %p142, %p143
      %p146 = scmp.ne.s32.totalorder %s129, %s145
      %p147 = scmp.eq.s32.totalorder %s18, 0
      %p148 = por %p146, %p147
      %p149 = scmp.le.s32.totalorder 1, %s12
      %p150 = scmp.lt.s32.totalorder %s12, 3
      %p151 = pnand %p149, %p150
      %p152 = pneg %p151
      // Predicated region
      $region9: #{tpu_custom_call.1} parent=5 // pred_check
        _
      $region10: #{tpu_custom_call.1} parent=5 // pred_check_branch
        %154 = sbr.rel (%p151) target = $region12
      $region11: #{tpu_custom_call.1} parent=5 // pred_region
        %s155 = ssub.s32 %s12, 1
        // Predicated region
        $region13: #{tpu_custom_call.1} parent=11 // pred_check
          %p156 = pneg %p87
        $region14: #{tpu_custom_call.1} parent=11 // pred_check_branch
          %158 = sbr.rel (%p156) target = $region16
        $region15: #{tpu_custom_call.1} parent=11 // pred_region
          %s159 = smul.u32 16, %s24
          %p160 = scmp.lt.s32.totalorder %s159, 15
          %s161 = scalar_select %p160, %s159, 15
          %p162 = scmp.lt.s32.totalorder %s23, 0
          %s163 = scalar_select %p162, %s23, 0
          %s164 = sadd.s32 %s163, %s161
          %s165 = smul.addr %s164, 4
          %s166 = scalar_lea.vmem %s1, %s165
          %s167 = smul.u32 16, %s24
        $region16: #{tpu_custom_call.1} parent=11 // pred_fallthru
          _
        // Predicated region
        $region17: #{tpu_custom_call.1} parent=11 // pred_check
          %p168 = pneg %p113
        $region18: #{tpu_custom_call.1} parent=11 // pred_check_branch
          %170 = sbr.rel (%p168) target = $region20
        $region19: #{tpu_custom_call.1} parent=11 // pred_region
          %p171 = scmp.lt.s32.totalorder %s23, 0
          %s172 = scalar_select %p171, %s23, 0
          %s173 = scalar_lea.vmem %s2, %s172
        $region20: #{tpu_custom_call.1} parent=11 // pred_fallthru
          _
      $region12: #{tpu_custom_call.1} parent=5 // pred_fallthru
        _
      %p174 = scmp.lt.s32.totalorder %s12, 2
      // Predicated region
      $region21: #{tpu_custom_call.1} parent=5 // pred_check
        %p175 = pneg %p174
      $region22: #{tpu_custom_call.1} parent=5 // pred_check_branch
        %177 = sbr.rel (%p175) target = $region24
      $region23: #{tpu_custom_call.1} parent=5 // pred_region
        // Predicated region
        $region25: #{tpu_custom_call.1} parent=23 // pred_check
          %p178 = pneg %p53
        $region26: #{tpu_custom_call.1} parent=23 // pred_check_branch
          %180 = sbr.rel (%p178) target = $region28
        $region27: #{tpu_custom_call.1} parent=23 // pred_region
          %s181 = sand.u32 %s43, 1
          %s182 = scalar_lea.sflag [#allocation4], %s181
          %s183 = sand.u32 %s43, 1
          %s184 = smul.addr %s183, 128
          %s185 = scalar_lea.vmem [#allocation3], %s184
          %s186 = smul.u32 32, %s19
          %s188 = ssub.s32 2048, 2048
          %189 = vsyncadd %s182, %s188
          %s190 = sadd.s32 %s21, %s186
          %s191 = smul.addr %s190, 64
          %s192 = scalar_lea.hbm %s0, %s191
          %s193 = sshll.u32 %s185, 4
          %s194 = int_to_ptr.vmem [resolvable:$true] %s193
          %199 = dma.hbm_to_vmem [thread:$0]  %s192, 2048, %s194, %s182, 64, 64, 4
        $region28: #{tpu_custom_call.1} parent=23 // pred_fallthru
          _
      $region24: #{tpu_custom_call.1} parent=5 // pred_fallthru
        _
      %p200 = scmp.le.s32.totalorder 1, %s12
      %p201 = scmp.lt.s32.totalorder %s12, 3
      %p202 = pnand %p200, %p201
      %p203 = pneg %p202
      // Predicated region
      $region29: #{tpu_custom_call.1} parent=5 // pred_check
        _
      $region30: #{tpu_custom_call.1} parent=5 // pred_check_branch
        %205 = sbr.rel (%p202) target = $region32
      $region31: #{tpu_custom_call.1} parent=5 // pred_region
        %s206 = ssub.s32 %s12, 1
        %s207 = sand.u32 %s46, 1
        %s208 = scalar_lea.sflag [#allocation4], %s207
        %s209 = sand.u32 %s46, 1
        %s210 = smul.addr %s209, 128
        %s211 = scalar_lea.vmem [#allocation3], %s210
        // Predicated region
        $region33: #{tpu_custom_call.1} parent=31 // pred_check
          %p212 = pneg %p59
        $region34: #{tpu_custom_call.1} parent=31 // pred_check_branch
          %214 = sbr.rel (%p212) target = $region36
        $region35: #{tpu_custom_call.1} parent=31 // pred_region
          %215 = dma.done %s208, 2048
        $region36: #{tpu_custom_call.1} parent=31 // pred_fallthru
          _
        %s216 = sand.u32 %s46, 1
        %s217 = scalar_lea.sflag [#allocation4], %s216
        %s218 = sand.u32 %s46, 1
        %s219 = smul.addr %s218, 128
        %s220 = scalar_lea.vmem [#allocation3], %s219
        %p221 = pneg %p59
        %p222 = pneg %p56
        %s223 = smul.u32 16, %s24
        %p224 = scmp.lt.s32.totalorder %s223, 15
        %s225 = scalar_select %p224, %s223, 15
        %p226 = scmp.lt.s32.totalorder %s23, 0
        %s227 = scalar_select %p226, %s23, 0
        %s228 = sadd.s32 %s227, %s225
        %s229 = smul.addr %s228, 4
        %s230 = scalar_lea.vmem %s1, %s229
        %p231 = pneg %p87
        %p232 = pneg %p84
        %p233 = scmp.lt.s32.totalorder %s23, 0
        %s234 = scalar_select %p233, %s23, 0
        %s235 = scalar_lea.vmem %s2, %s234
        %p236 = pneg %p113
        %p237 = pneg %p110
        %p238 = pneg %p141
        %p239 = pneg %p138
        %s240 = smul.u32 32, %s22
        %p241 = scmp.lt.s32.totalorder %s240, 63
        %s242 = scalar_select %p241, %s240, 63
        %p243 = scmp.lt.s32.totalorder %s23, 0
        %s244 = scalar_select %p243, %s23, 0
        %s245 = sadd.s32 %s244, %s242
        %s246 = smul.addr %s245, 4
        %s247 = scalar_lea.vmem %s3, %s246
        %s248 = smul.u32 32, %s22
        %s249 = smul.u32 16, %s24
        %p250 = scmp.lt.s32.totalorder %s249, 15
        %s251 = scalar_select %p250, %s249, 15
        %p252 = scmp.lt.s32.totalorder %s23, 0
        %s253 = scalar_select %p252, %s23, 0
        %s254 = sadd.s32 %s253, %s251
        %s255 = smul.addr %s254, 4
        %s256 = scalar_lea.vmem %s1, %s255
        %s257 = smul.u32 16, %s24
        %p258 = scmp.lt.s32.totalorder %s23, 0
        %s259 = scalar_select %p258, %s23, 0
        %s260 = scalar_lea.vmem %s2, %s259
        %s261 = smul.u32 32, %s22
        %p262 = scmp.lt.s32.totalorder %s261, 63
        %s263 = scalar_select %p262, %s261, 63
        %p264 = scmp.lt.s32.totalorder %s23, 0
        %s265 = scalar_select %p264, %s23, 0
        %s266 = sadd.s32 %s265, %s263
        %s267 = smul.addr %s266, 4
        %s268 = scalar_lea.vmem %s3, %s267
        %s269 = smul.u32 32, %s22
        %p271 = scmp.eq.s32.totalorder %s24, 0
        // Predicated region
        $region37: #{tpu_custom_call.1} parent=31 // pred_check
          %p272 = pneg %p271
        $region38: #{tpu_custom_call.1} parent=31 // pred_check_branch
          %274 = sbr.rel (%p272) target = $region40
        $region39: #{tpu_custom_call.1} parent=31 // pred_region
          %275 = vst [vmem:[#allocation2] sm:$0xff] 0.0
          %276 = vst [vmem:[#allocation2 + $0x8] sm:$0xff] 0.0
          %277 = vst [vmem:[#allocation2 + $0x10] sm:$0xff] 0.0
          %278 = vst [vmem:[#allocation2 + $0x18] sm:$0xff] 0.0
          %279 = vst [vmem:[#allocation2 + $0x20] sm:$0xff] 0.0
          %280 = vst [vmem:[#allocation2 + $0x28] sm:$0xff] 0.0
          %281 = vst [vmem:[#allocation2 + $0x30] sm:$0xff] 0.0
          %282 = vst [vmem:[#allocation2 + $0x38] sm:$0xff] 0.0
          %283 = vst [vmem:[#allocation2 + $0x40] sm:$0xff] 0.0
          %284 = vst [vmem:[#allocation2 + $0x48] sm:$0xff] 0.0
          %285 = vst [vmem:[#allocation2 + $0x50] sm:$0xff] 0.0
          %286 = vst [vmem:[#allocation2 + $0x58] sm:$0xff] 0.0
          %287 = vst [vmem:[#allocation2 + $0x60] sm:$0xff] 0.0
          %288 = vst [vmem:[#allocation2 + $0x68] sm:$0xff] 0.0
          %289 = vst [vmem:[#allocation2 + $0x70] sm:$0xff] 0.0
          %290 = vst [vmem:[#allocation2 + $0x78] sm:$0xff] 0.0
          %291 = vst [vmem:[#allocation2 + $0x80] sm:$0xff] 0.0
          %292 = vst [vmem:[#allocation2 + $0x88] sm:$0xff] 0.0
          %293 = vst [vmem:[#allocation2 + $0x90] sm:$0xff] 0.0
          %294 = vst [vmem:[#allocation2 + $0x98] sm:$0xff] 0.0
          %295 = vst [vmem:[#allocation2 + $0xa0] sm:$0xff] 0.0
          %296 = vst [vmem:[#allocation2 + $0xa8] sm:$0xff] 0.0
          %297 = vst [vmem:[#allocation2 + $0xb0] sm:$0xff] 0.0
          %298 = vst [vmem:[#allocation2 + $0xb8] sm:$0xff] 0.0
          %299 = vst [vmem:[#allocation2 + $0xc0] sm:$0xff] 0.0
          %300 = vst [vmem:[#allocation2 + $0xc8] sm:$0xff] 0.0
          %301 = vst [vmem:[#allocation2 + $0xd0] sm:$0xff] 0.0
          %302 = vst [vmem:[#allocation2 + $0xd8] sm:$0xff] 0.0
          %303 = vst [vmem:[#allocation2 + $0xe0] sm:$0xff] 0.0
          %304 = vst [vmem:[#allocation2 + $0xe8] sm:$0xff] 0.0
          %305 = vst [vmem:[#allocation2 + $0xf0] sm:$0xff] 0.0
          %306 = vst [vmem:[#allocation2 + $0xf8] sm:$0xff] 0.0
        $region40: #{tpu_custom_call.1} parent=31 // pred_fallthru
          _
        %v307 = vld [vmem:[%s211] sm:$0xf]
        %v308 = vld [vmem:[%s211 + $0x4] sm:$0xf]
        %v309 = vld [vmem:[%s211 + $0x8] sm:$0xf]
        %v310 = vld [vmem:[%s211 + $0xc] sm:$0xf]
        %v311 = vld [vmem:[%s211 + $0x10] sm:$0xf]
        %v312 = vld [vmem:[%s211 + $0x14] sm:$0xf]
        %v313 = vld [vmem:[%s211 + $0x18] sm:$0xf]
        %v314 = vld [vmem:[%s211 + $0x1c] sm:$0xf]
        %v315 = vld [vmem:[%s211 + $0x20] sm:$0xf]
        %v316 = vld [vmem:[%s211 + $0x24] sm:$0xf]
        %v317 = vld [vmem:[%s211 + $0x28] sm:$0xf]
        %v318 = vld [vmem:[%s211 + $0x2c] sm:$0xf]
        %v319 = vld [vmem:[%s211 + $0x30] sm:$0xf]
        %v320 = vld [vmem:[%s211 + $0x34] sm:$0xf]
        %v321 = vld [vmem:[%s211 + $0x38] sm:$0xf]
        %v322 = vld [vmem:[%s211 + $0x3c] sm:$0xf]
        %v323 = vld [vmem:[%s211 + $0x40] sm:$0xf]
        %v324 = vld [vmem:[%s211 + $0x44] sm:$0xf]
        %v325 = vld [vmem:[%s211 + $0x48] sm:$0xf]
        %v326 = vld [vmem:[%s211 + $0x4c] sm:$0xf]
        %v327 = vld [vmem:[%s211 + $0x50] sm:$0xf]
        %v328 = vld [vmem:[%s211 + $0x54] sm:$0xf]
        %v329 = vld [vmem:[%s211 + $0x58] sm:$0xf]
        %v330 = vld [vmem:[%s211 + $0x5c] sm:$0xf]
        %v331 = vld [vmem:[%s211 + $0x60] sm:$0xf]
        %v332 = vld [vmem:[%s211 + $0x64] sm:$0xf]
        %v333 = vld [vmem:[%s211 + $0x68] sm:$0xf]
        %v334 = vld [vmem:[%s211 + $0x6c] sm:$0xf]
        %v335 = vld [vmem:[%s211 + $0x70] sm:$0xf]
        %v336 = vld [vmem:[%s211 + $0x74] sm:$0xf]
        %v337 = vld [vmem:[%s211 + $0x78] sm:$0xf]
        %v338 = vld [vmem:[%s211 + $0x7c] sm:$0xf]
        %v339 = vld [vmem:[%s256] sm:$0xf]
        %v340 = vld [vmem:[%s256 + $0x4] sm:$0xf]
        %v341 = vld [vmem:[%s256 + $0x8] sm:$0xf]
        %v342 = vld [vmem:[%s256 + $0xc] sm:$0xf]
        %v343 = vld [vmem:[%s256 + $0x10] sm:$0xf]
        %v344 = vld [vmem:[%s256 + $0x14] sm:$0xf]
        %v345 = vld [vmem:[%s256 + $0x18] sm:$0xf]
        %v346 = vld [vmem:[%s256 + $0x1c] sm:$0xf]
        %v347 = vld [vmem:[%s256 + $0x20] sm:$0xf]
        %v348 = vld [vmem:[%s256 + $0x24] sm:$0xf]
        %v349 = vld [vmem:[%s256 + $0x28] sm:$0xf]
        %v350 = vld [vmem:[%s256 + $0x2c] sm:$0xf]
        %v351 = vld [vmem:[%s256 + $0x30] sm:$0xf]
        %v352 = vld [vmem:[%s256 + $0x34] sm:$0xf]
        %v353 = vld [vmem:[%s256 + $0x38] sm:$0xf]
        %v354 = vld [vmem:[%s256 + $0x3c] sm:$0xf]
        %v355 = vld [vmem:[#allocation2] sm:$0xff]
        %v356 = vld [vmem:[#allocation2 + $0x8] sm:$0xff]
        %v357 = vld [vmem:[#allocation2 + $0x10] sm:$0xff]
        %v358 = vld [vmem:[#allocation2 + $0x18] sm:$0xff]
        %v359 = vld [vmem:[#allocation2 + $0x20] sm:$0xff]
        %v360 = vld [vmem:[#allocation2 + $0x28] sm:$0xff]
        %v361 = vld [vmem:[#allocation2 + $0x30] sm:$0xff]
        %v362 = vld [vmem:[#allocation2 + $0x38] sm:$0xff]
        %v363 = vld [vmem:[#allocation2 + $0x40] sm:$0xff]
        %v364 = vld [vmem:[#allocation2 + $0x48] sm:$0xff]
        %v365 = vld [vmem:[#allocation2 + $0x50] sm:$0xff]
        %v366 = vld [vmem:[#allocation2 + $0x58] sm:$0xff]
        %v367 = vld [vmem:[#allocation2 + $0x60] sm:$0xff]
        %v368 = vld [vmem:[#allocation2 + $0x68] sm:$0xff]
        %v369 = vld [vmem:[#allocation2 + $0x70] sm:$0xff]
        %v370 = vld [vmem:[#allocation2 + $0x78] sm:$0xff]
        %v371 = vld [vmem:[#allocation2 + $0x80] sm:$0xff]
        %v372 = vld [vmem:[#allocation2 + $0x88] sm:$0xff]
        %v373 = vld [vmem:[#allocation2 + $0x90] sm:$0xff]
        %v374 = vld [vmem:[#allocation2 + $0x98] sm:$0xff]
        %v375 = vld [vmem:[#allocation2 + $0xa0] sm:$0xff]
        %v376 = vld [vmem:[#allocation2 + $0xa8] sm:$0xff]
        %v377 = vld [vmem:[#allocation2 + $0xb0] sm:$0xff]
        %v378 = vld [vmem:[#allocation2 + $0xb8] sm:$0xff]
        %v379 = vld [vmem:[#allocation2 + $0xc0] sm:$0xff]
        %v380 = vld [vmem:[#allocation2 + $0xc8] sm:$0xff]
        %v381 = vld [vmem:[#allocation2 + $0xd0] sm:$0xff]
        %v382 = vld [vmem:[#allocation2 + $0xd8] sm:$0xff]
        %v383 = vld [vmem:[#allocation2 + $0xe0] sm:$0xff]
        %v384 = vld [vmem:[#allocation2 + $0xe8] sm:$0xff]
        %v385 = vld [vmem:[#allocation2 + $0xf0] sm:$0xff]
        %v386 = vld [vmem:[#allocation2 + $0xf8] sm:$0xff]
        %v419 = vunpack.c.l.b16 %v307
        %v420 = vunpack.c.l.b16 %v308
        %v421 = vunpack.c.l.b16 %v309
        %v422 = vunpack.c.l.b16 %v310
        %v423 = vunpack.c.l.b16 %v311
        %v424 = vunpack.c.l.b16 %v312
        %v425 = vunpack.c.l.b16 %v313
        %v426 = vunpack.c.l.b16 %v314
        %v427 = vunpack.c.l.b16 %v315
        %v428 = vunpack.c.l.b16 %v316
        %v429 = vunpack.c.l.b16 %v317
        %v430 = vunpack.c.l.b16 %v318
        %v431 = vunpack.c.l.b16 %v319
        %v432 = vunpack.c.l.b16 %v320
        %v433 = vunpack.c.l.b16 %v321
        %v434 = vunpack.c.l.b16 %v322
        %v435 = vunpack.c.l.b16 %v323
        %v436 = vunpack.c.l.b16 %v324
        %v437 = vunpack.c.l.b16 %v325
        %v438 = vunpack.c.l.b16 %v326
        %v439 = vunpack.c.l.b16 %v327
        %v440 = vunpack.c.l.b16 %v328
        %v441 = vunpack.c.l.b16 %v329
        %v442 = vunpack.c.l.b16 %v330
        %v443 = vunpack.c.l.b16 %v331
        %v444 = vunpack.c.l.b16 %v332
        %v445 = vunpack.c.l.b16 %v333
        %v446 = vunpack.c.l.b16 %v334
        %v447 = vunpack.c.l.b16 %v335
        %v448 = vunpack.c.l.b16 %v336
        %v449 = vunpack.c.l.b16 %v337
        %v450 = vunpack.c.l.b16 %v338
        %v451 = vpack.c.b16 %v420, %v419
        %v452 = vpack.c.b16 %v422, %v421
        %v453 = vpack.c.b16 %v424, %v423
        %v454 = vpack.c.b16 %v426, %v425
        %v455 = vpack.c.b16 %v428, %v427
        %v456 = vpack.c.b16 %v430, %v429
        %v457 = vpack.c.b16 %v432, %v431
        %v458 = vpack.c.b16 %v434, %v433
        %v459 = vpack.c.b16 %v436, %v435
        %v460 = vpack.c.b16 %v438, %v437
        %v461 = vpack.c.b16 %v440, %v439
        %v462 = vpack.c.b16 %v442, %v441
        %v463 = vpack.c.b16 %v444, %v443
        %v464 = vpack.c.b16 %v446, %v445
        %v465 = vpack.c.b16 %v448, %v447
        %v466 = vpack.c.b16 %v450, %v449
        %v499 = vunpack.c.l.b16 %v339
        %v500 = vunpack.c.l.b16 %v340
        %v501 = vunpack.c.l.b16 %v341
        %v502 = vunpack.c.l.b16 %v342
        %v503 = vunpack.c.l.b16 %v343
        %v504 = vunpack.c.l.b16 %v344
        %v505 = vunpack.c.l.b16 %v345
        %v506 = vunpack.c.l.b16 %v346
        %v507 = vunpack.c.l.b16 %v347
        %v508 = vunpack.c.l.b16 %v348
        %v509 = vunpack.c.l.b16 %v349
        %v510 = vunpack.c.l.b16 %v350
        %v511 = vunpack.c.l.b16 %v351
        %v512 = vunpack.c.l.b16 %v352
        %v513 = vunpack.c.l.b16 %v353
        %v514 = vunpack.c.l.b16 %v354
        %v515 = vpack.c.b16 %v500, %v499
        %v516 = vpack.c.b16 %v502, %v501
        %v517 = vpack.c.b16 %v504, %v503
        %v518 = vpack.c.b16 %v506, %v505
        %v519 = vpack.c.b16 %v508, %v507
        %v520 = vpack.c.b16 %v510, %v509
        %v521 = vpack.c.b16 %v512, %v511
        %v522 = vpack.c.b16 %v514, %v513
        %531 = vmatprep.subr.bf16.mxu0 0
        %532 = vmatpush1.bf16.msra.mxu0 %v522
        %533 = vmatprep.subr.bf16.mxu0 0
        %534 = vmatpush1.bf16.msra.mxu0 %v521
        %535 = vmatprep.subr.bf16.mxu0 0
        %536 = vmatpush1.bf16.msra.mxu0 %v520
        %537 = vmatprep.subr.bf16.mxu0 0
        %538 = vmatpush1.bf16.msra.mxu0 %v519
        %539 = vmatprep.subr.bf16.mxu0 0
        %540 = vmatpush1.bf16.msra.mxu0 %v518
        %541 = vmatprep.subr.bf16.mxu0 0
        %542 = vmatpush1.bf16.msra.mxu0 %v517
        %543 = vmatprep.subr.bf16.mxu0 0
        %544 = vmatpush1.bf16.msra.mxu0 %v516
        %545 = vmatprep.subr.bf16.mxu0 0
        %546 = vmatpush1.bf16.msra.mxu0 %v515
        %547 = vmatprep.subr.bf16.mxu0 0
        %548 = vmatpush2.bf16.msra.mxu0 0
        %549 = vmatprep.subr.bf16.mxu0 0
        %550 = vmatpush2.bf16.msra.mxu0 0
        %551 = vmatprep.subr.bf16.mxu0 0
        %552 = vmatpush2.bf16.msra.mxu0 0
        %553 = vmatprep.subr.bf16.mxu0 0
        %554 = vmatpush2.bf16.msra.mxu0 0
        %555 = vmatprep.subr.bf16.mxu0 0
        %556 = vmatpush2.bf16.msra.mxu0 0
        %557 = vmatprep.subr.bf16.mxu0 0
        %558 = vmatpush2.bf16.msra.mxu0 0
        %559 = vmatprep.subr.bf16.mxu0 0
        %560 = vmatpush2.bf16.msra.mxu0 0
        %561 = vmatprep.subr.bf16.mxu0 0
        %562 = vmatpush2.bf16.msra.mxu0 0
        %563 = vmatprep.mubr.bf16.mxu0 0
        %564 = vmatmul.mubr.bf16.gmra.mxu0 %v451
        %v565 = vpop.f32.mrf.mxu0
        %v566 = vadd.f32 0.0, %v565
        %v567 = vpop.f32.mrf.mxu0
        %v568 = vpop.f32.mrf.mxu0
        %v569 = vadd.f32 0.0, %v568
        %v570 = vpop.f32.mrf.mxu0
        %571 = vmatprep.mubr.bf16.mxu0 0
        %572 = vmatmul.mubr.bf16.gmra.mxu0 %v452
        %v573 = vpop.f32.mrf.mxu0
        %v574 = vadd.f32 0.0, %v573
        %v575 = vpop.f32.mrf.mxu0
        %v576 = vpop.f32.mrf.mxu0
        %v577 = vadd.f32 0.0, %v576
        %v578 = vpop.f32.mrf.mxu0
        %579 = vmatprep.mubr.bf16.mxu0 0
        %580 = vmatmul.mubr.bf16.gmra.mxu0 %v453
        %v581 = vpop.f32.mrf.mxu0
        %v582 = vadd.f32 0.0, %v581
        %v583 = vpop.f32.mrf.mxu0
        %v584 = vpop.f32.mrf.mxu0
        %v585 = vadd.f32 0.0, %v584
        %v586 = vpop.f32.mrf.mxu0
        %587 = vmatprep.mubr.bf16.mxu0 0
        %588 = vmatmul.mubr.bf16.gmra.mxu0 %v454
        %v589 = vpop.f32.mrf.mxu0
        %v590 = vadd.f32 0.0, %v589
        %v591 = vpop.f32.mrf.mxu0
        %v592 = vpop.f32.mrf.mxu0
        %v593 = vadd.f32 0.0, %v592
        %v594 = vpop.f32.mrf.mxu0
        %595 = vmatprep.mubr.bf16.mxu0 0
        %596 = vmatmul.mubr.bf16.gmra.mxu0 %v455
        %v597 = vpop.f32.mrf.mxu0
        %v598 = vadd.f32 0.0, %v597
        %v599 = vpop.f32.mrf.mxu0
        %v600 = vpop.f32.mrf.mxu0
        %v601 = vadd.f32 0.0, %v600
        %v602 = vpop.f32.mrf.mxu0
        %603 = vmatprep.mubr.bf16.mxu0 0
        %604 = vmatmul.mubr.bf16.gmra.mxu0 %v456
        %v605 = vpop.f32.mrf.mxu0
        %v606 = vadd.f32 0.0, %v605
        %v607 = vpop.f32.mrf.mxu0
        %v608 = vpop.f32.mrf.mxu0
        %v609 = vadd.f32 0.0, %v608
        %v610 = vpop.f32.mrf.mxu0
        %611 = vmatprep.mubr.bf16.mxu0 0
        %612 = vmatmul.mubr.bf16.gmra.mxu0 %v457
        %v613 = vpop.f32.mrf.mxu0
        %v614 = vadd.f32 0.0, %v613
        %v615 = vpop.f32.mrf.mxu0
        %v616 = vpop.f32.mrf.mxu0
        %v617 = vadd.f32 0.0, %v616
        %v618 = vpop.f32.mrf.mxu0
        %619 = vmatprep.mubr.bf16.mxu0 0
        %620 = vmatmul.mubr.bf16.gmra.mxu0 %v458
        %v621 = vpop.f32.mrf.mxu0
        %v622 = vadd.f32 0.0, %v621
        %v623 = vpop.f32.mrf.mxu0
        %v624 = vpop.f32.mrf.mxu0
        %v625 = vadd.f32 0.0, %v624
        %v626 = vpop.f32.mrf.mxu0
        %627 = vmatprep.mubr.bf16.mxu0 0
        %628 = vmatmul.mubr.bf16.gmra.mxu0 %v459
        %v629 = vpop.f32.mrf.mxu0
        %v630 = vadd.f32 0.0, %v629
        %v631 = vpop.f32.mrf.mxu0
        %v632 = vpop.f32.mrf.mxu0
        %v633 = vadd.f32 0.0, %v632
        %v634 = vpop.f32.mrf.mxu0
        %635 = vmatprep.mubr.bf16.mxu0 0
        %636 = vmatmul.mubr.bf16.gmra.mxu0 %v460
        %v637 = vpop.f32.mrf.mxu0
        %v638 = vadd.f32 0.0, %v637
        %v639 = vpop.f32.mrf.mxu0
        %v640 = vpop.f32.mrf.mxu0
        %v641 = vadd.f32 0.0, %v640
        %v642 = vpop.f32.mrf.mxu0
        %643 = vmatprep.mubr.bf16.mxu0 0
        %644 = vmatmul.mubr.bf16.gmra.mxu0 %v461
        %v645 = vpop.f32.mrf.mxu0
        %v646 = vadd.f32 0.0, %v645
        %v647 = vpop.f32.mrf.mxu0
        %v648 = vpop.f32.mrf.mxu0
        %v649 = vadd.f32 0.0, %v648
        %v650 = vpop.f32.mrf.mxu0
        %651 = vmatprep.mubr.bf16.mxu0 0
        %652 = vmatmul.mubr.bf16.gmra.mxu0 %v462
        %v653 = vpop.f32.mrf.mxu0
        %v654 = vadd.f32 0.0, %v653
        %v655 = vpop.f32.mrf.mxu0
        %v656 = vpop.f32.mrf.mxu0
        %v657 = vadd.f32 0.0, %v656
        %v658 = vpop.f32.mrf.mxu0
        %659 = vmatprep.mubr.bf16.mxu0 0
        %660 = vmatmul.mubr.bf16.gmra.mxu0 %v463
        %v661 = vpop.f32.mrf.mxu0
        %v662 = vadd.f32 0.0, %v661
        %v663 = vpop.f32.mrf.mxu0
        %v664 = vpop.f32.mrf.mxu0
        %v665 = vadd.f32 0.0, %v664
        %v666 = vpop.f32.mrf.mxu0
        %667 = vmatprep.mubr.bf16.mxu0 0
        %668 = vmatmul.mubr.bf16.gmra.mxu0 %v464
        %v669 = vpop.f32.mrf.mxu0
        %v670 = vadd.f32 0.0, %v669
        %v671 = vpop.f32.mrf.mxu0
        %v672 = vpop.f32.mrf.mxu0
        %v673 = vadd.f32 0.0, %v672
        %v674 = vpop.f32.mrf.mxu0
        %675 = vmatprep.mubr.bf16.mxu0 0
        %676 = vmatmul.mubr.bf16.gmra.mxu0 %v465
        %v677 = vpop.f32.mrf.mxu0
        %v678 = vadd.f32 0.0, %v677
        %v679 = vpop.f32.mrf.mxu0
        %v680 = vpop.f32.mrf.mxu0
        %v681 = vadd.f32 0.0, %v680
        %v682 = vpop.f32.mrf.mxu0
        %683 = vmatprep.mubr.bf16.mxu0 0
        %684 = vmatmul.mubr.bf16.gmra.mxu0 %v466
        %v685 = vpop.f32.mrf.mxu0
        %v686 = vadd.f32 0.0, %v685
        %v687 = vpop.f32.mrf.mxu0
        %v688 = vpop.f32.mrf.mxu0
        %v689 = vadd.f32 0.0, %v688
        %v690 = vpop.f32.mrf.mxu0
        %691 = vdwg.mxu0
        %v692 = vadd.f32 %v355, %v566
        %v693 = vadd.f32 %v356, %v569
        %v694 = vadd.f32 %v357, %v574
        %v695 = vadd.f32 %v358, %v577
        %v696 = vadd.f32 %v359, %v582
        %v697 = vadd.f32 %v360, %v585
        %v698 = vadd.f32 %v361, %v590
        %v699 = vadd.f32 %v362, %v593
        %v700 = vadd.f32 %v363, %v598
        %v701 = vadd.f32 %v364, %v601
        %v702 = vadd.f32 %v365, %v606
        %v703 = vadd.f32 %v366, %v609
        %v704 = vadd.f32 %v367, %v614
        %v705 = vadd.f32 %v368, %v617
        %v706 = vadd.f32 %v369, %v622
        %v707 = vadd.f32 %v370, %v625
        %v708 = vadd.f32 %v371, %v630
        %v709 = vadd.f32 %v372, %v633
        %v710 = vadd.f32 %v373, %v638
        %v711 = vadd.f32 %v374, %v641
        %v712 = vadd.f32 %v375, %v646
        %v713 = vadd.f32 %v376, %v649
        %v714 = vadd.f32 %v377, %v654
        %v715 = vadd.f32 %v378, %v657
        %v716 = vadd.f32 %v379, %v662
        %v717 = vadd.f32 %v380, %v665
        %v718 = vadd.f32 %v381, %v670
        %v719 = vadd.f32 %v382, %v673
        %v720 = vadd.f32 %v383, %v678
        %v721 = vadd.f32 %v384, %v681
        %v722 = vadd.f32 %v385, %v686
        %v723 = vadd.f32 %v386, %v689
        %724 = vst [vmem:[#allocation2] sm:$0xff] %v692
        %725 = vst [vmem:[#allocation2 + $0x8] sm:$0xff] %v693
        %726 = vst [vmem:[#allocation2 + $0x10] sm:$0xff] %v694
        %727 = vst [vmem:[#allocation2 + $0x18] sm:$0xff] %v695
        %728 = vst [vmem:[#allocation2 + $0x20] sm:$0xff] %v696
        %729 = vst [vmem:[#allocation2 + $0x28] sm:$0xff] %v697
        %730 = vst [vmem:[#allocation2 + $0x30] sm:$0xff] %v698
        %731 = vst [vmem:[#allocation2 + $0x38] sm:$0xff] %v699
        %732 = vst [vmem:[#allocation2 + $0x40] sm:$0xff] %v700
        %733 = vst [vmem:[#allocation2 + $0x48] sm:$0xff] %v701
        %734 = vst [vmem:[#allocation2 + $0x50] sm:$0xff] %v702
        %735 = vst [vmem:[#allocation2 + $0x58] sm:$0xff] %v703
        %736 = vst [vmem:[#allocation2 + $0x60] sm:$0xff] %v704
        %737 = vst [vmem:[#allocation2 + $0x68] sm:$0xff] %v705
        %738 = vst [vmem:[#allocation2 + $0x70] sm:$0xff] %v706
        %739 = vst [vmem:[#allocation2 + $0x78] sm:$0xff] %v707
        %740 = vst [vmem:[#allocation2 + $0x80] sm:$0xff] %v708
        %741 = vst [vmem:[#allocation2 + $0x88] sm:$0xff] %v709
        %742 = vst [vmem:[#allocation2 + $0x90] sm:$0xff] %v710
        %743 = vst [vmem:[#allocation2 + $0x98] sm:$0xff] %v711
        %744 = vst [vmem:[#allocation2 + $0xa0] sm:$0xff] %v712
        %745 = vst [vmem:[#allocation2 + $0xa8] sm:$0xff] %v713
        %746 = vst [vmem:[#allocation2 + $0xb0] sm:$0xff] %v714
        %747 = vst [vmem:[#allocation2 + $0xb8] sm:$0xff] %v715
        %748 = vst [vmem:[#allocation2 + $0xc0] sm:$0xff] %v716
        %749 = vst [vmem:[#allocation2 + $0xc8] sm:$0xff] %v717
        %750 = vst [vmem:[#allocation2 + $0xd0] sm:$0xff] %v718
        %751 = vst [vmem:[#allocation2 + $0xd8] sm:$0xff] %v719
        %752 = vst [vmem:[#allocation2 + $0xe0] sm:$0xff] %v720
        %753 = vst [vmem:[#allocation2 + $0xe8] sm:$0xff] %v721
        %754 = vst [vmem:[#allocation2 + $0xf0] sm:$0xff] %v722
        %755 = vst [vmem:[#allocation2 + $0xf8] sm:$0xff] %v723
        // Predicated region
        $region41: #{tpu_custom_call.1} parent=31 // pred_check
          %p756 = pneg %p271
        $region42: #{tpu_custom_call.1} parent=31 // pred_check_branch
          %758 = sbr.rel (%p756) target = $region44
        $region43: #{tpu_custom_call.1} parent=31 // pred_region
          %v759 = vld [vmem:[#allocation2] sm:$0xff]
          %v760 = vld [vmem:[#allocation2 + $0x8] sm:$0xff]
          %v761 = vld [vmem:[#allocation2 + $0x10] sm:$0xff]
          %v762 = vld [vmem:[#allocation2 + $0x18] sm:$0xff]
          %v763 = vld [vmem:[#allocation2 + $0x20] sm:$0xff]
          %v764 = vld [vmem:[#allocation2 + $0x28] sm:$0xff]
          %v765 = vld [vmem:[#allocation2 + $0x30] sm:$0xff]
          %v766 = vld [vmem:[#allocation2 + $0x38] sm:$0xff]
          %v767 = vld [vmem:[#allocation2 + $0x40] sm:$0xff]
          %v768 = vld [vmem:[#allocation2 + $0x48] sm:$0xff]
          %v769 = vld [vmem:[#allocation2 + $0x50] sm:$0xff]
          %v770 = vld [vmem:[#allocation2 + $0x58] sm:$0xff]
          %v771 = vld [vmem:[#allocation2 + $0x60] sm:$0xff]
          %v772 = vld [vmem:[#allocation2 + $0x68] sm:$0xff]
          %v773 = vld [vmem:[#allocation2 + $0x70] sm:$0xff]
          %v774 = vld [vmem:[#allocation2 + $0x78] sm:$0xff]
          %v775 = vld [vmem:[#allocation2 + $0x80] sm:$0xff]
          %v776 = vld [vmem:[#allocation2 + $0x88] sm:$0xff]
          %v777 = vld [vmem:[#allocation2 + $0x90] sm:$0xff]
          %v778 = vld [vmem:[#allocation2 + $0x98] sm:$0xff]
          %v779 = vld [vmem:[#allocation2 + $0xa0] sm:$0xff]
          %v780 = vld [vmem:[#allocation2 + $0xa8] sm:$0xff]
          %v781 = vld [vmem:[#allocation2 + $0xb0] sm:$0xff]
          %v782 = vld [vmem:[#allocation2 + $0xb8] sm:$0xff]
          %v783 = vld [vmem:[#allocation2 + $0xc0] sm:$0xff]
          %v784 = vld [vmem:[#allocation2 + $0xc8] sm:$0xff]
          %v785 = vld [vmem:[#allocation2 + $0xd0] sm:$0xff]
          %v786 = vld [vmem:[#allocation2 + $0xd8] sm:$0xff]
          %v787 = vld [vmem:[#allocation2 + $0xe0] sm:$0xff]
          %v788 = vld [vmem:[#allocation2 + $0xe8] sm:$0xff]
          %v789 = vld [vmem:[#allocation2 + $0xf0] sm:$0xff]
          %v790 = vld [vmem:[#allocation2 + $0xf8] sm:$0xff]
          %v791 = vld [vmem:[%s260] sm:$0x1]
          %v793 = vlaneseq
          %v794 = vshrl.u32 %v793, 7
          %v795 = vsub.s32 0, %v794
          %v796 = vrot.slane %v791, %v795
          %v798 = vadd.f32 %v759, %v796
          %v799 = vadd.f32 %v760, %v796
          %v800 = vadd.f32 %v761, %v796
          %v801 = vadd.f32 %v762, %v796
          %v802 = vadd.f32 %v763, %v796
          %v803 = vadd.f32 %v764, %v796
          %v804 = vadd.f32 %v765, %v796
          %v805 = vadd.f32 %v766, %v796
          %v806 = vadd.f32 %v767, %v796
          %v807 = vadd.f32 %v768, %v796
          %v808 = vadd.f32 %v769, %v796
          %v809 = vadd.f32 %v770, %v796
          %v810 = vadd.f32 %v771, %v796
          %v811 = vadd.f32 %v772, %v796
          %v812 = vadd.f32 %v773, %v796
          %v813 = vadd.f32 %v774, %v796
          %v814 = vadd.f32 %v775, %v796
          %v815 = vadd.f32 %v776, %v796
          %v816 = vadd.f32 %v777, %v796
          %v817 = vadd.f32 %v778, %v796
          %v818 = vadd.f32 %v779, %v796
          %v819 = vadd.f32 %v780, %v796
          %v820 = vadd.f32 %v781, %v796
          %v821 = vadd.f32 %v782, %v796
          %v822 = vadd.f32 %v783, %v796
          %v823 = vadd.f32 %v784, %v796
          %v824 = vadd.f32 %v785, %v796
          %v825 = vadd.f32 %v786, %v796
          %v826 = vadd.f32 %v787, %v796
          %v827 = vadd.f32 %v788, %v796
          %v828 = vadd.f32 %v789, %v796
          %v829 = vadd.f32 %v790, %v796
          %v830 = vpack.c.bf16 %v799, %v798
          %v831 = vpack.c.bf16 %v801, %v800
          %v832 = vpack.c.bf16 %v803, %v802
          %v833 = vpack.c.bf16 %v805, %v804
          %v834 = vpack.c.bf16 %v807, %v806
          %v835 = vpack.c.bf16 %v809, %v808
          %v836 = vpack.c.bf16 %v811, %v810
          %v837 = vpack.c.bf16 %v813, %v812
          %v838 = vpack.c.bf16 %v815, %v814
          %v839 = vpack.c.bf16 %v817, %v816
          %v840 = vpack.c.bf16 %v819, %v818
          %v841 = vpack.c.bf16 %v821, %v820
          %v842 = vpack.c.bf16 %v823, %v822
          %v843 = vpack.c.bf16 %v825, %v824
          %v844 = vpack.c.bf16 %v827, %v826
          %v845 = vpack.c.bf16 %v829, %v828
          %v862 = vunpack.c.l.b16 %v830
          %v863 = vunpack.c.h.b16 %v830
          %v864 = vunpack.c.l.b16 %v831
          %v865 = vunpack.c.h.b16 %v831
          %v866 = vunpack.c.l.b16 %v832
          %v867 = vunpack.c.h.b16 %v832
          %v868 = vunpack.c.l.b16 %v833
          %v869 = vunpack.c.h.b16 %v833
          %v870 = vunpack.c.l.b16 %v834
          %v871 = vunpack.c.h.b16 %v834
          %v872 = vunpack.c.l.b16 %v835
          %v873 = vunpack.c.h.b16 %v835
          %v874 = vunpack.c.l.b16 %v836
          %v875 = vunpack.c.h.b16 %v836
          %v876 = vunpack.c.l.b16 %v837
          %v877 = vunpack.c.h.b16 %v837
          %v878 = vunpack.c.l.b16 %v838
          %v879 = vunpack.c.h.b16 %v838
          %v880 = vunpack.c.l.b16 %v839
          %v881 = vunpack.c.h.b16 %v839
          %v882 = vunpack.c.l.b16 %v840
          %v883 = vunpack.c.h.b16 %v840
          %v884 = vunpack.c.l.b16 %v841
          %v885 = vunpack.c.h.b16 %v841
          %v886 = vunpack.c.l.b16 %v842
          %v887 = vunpack.c.h.b16 %v842
          %v888 = vunpack.c.l.b16 %v843
          %v889 = vunpack.c.h.b16 %v843
          %v890 = vunpack.c.l.b16 %v844
          %v891 = vunpack.c.h.b16 %v844
          %v892 = vunpack.c.l.b16 %v845
          %v893 = vunpack.c.h.b16 %v845
          %v894 = vpack.c.b16 %v862, %v862
          %v895 = vpack.c.b16 %v863, %v863
          %v896 = vpack.c.b16 %v864, %v864
          %v897 = vpack.c.b16 %v865, %v865
          %v898 = vpack.c.b16 %v866, %v866
          %v899 = vpack.c.b16 %v867, %v867
          %v900 = vpack.c.b16 %v868, %v868
          %v901 = vpack.c.b16 %v869, %v869
          %v902 = vpack.c.b16 %v870, %v870
          %v903 = vpack.c.b16 %v871, %v871
          %v904 = vpack.c.b16 %v872, %v872
          %v905 = vpack.c.b16 %v873, %v873
          %v906 = vpack.c.b16 %v874, %v874
          %v907 = vpack.c.b16 %v875, %v875
          %v908 = vpack.c.b16 %v876, %v876
          %v909 = vpack.c.b16 %v877, %v877
          %v910 = vpack.c.b16 %v878, %v878
          %v911 = vpack.c.b16 %v879, %v879
          %v912 = vpack.c.b16 %v880, %v880
          %v913 = vpack.c.b16 %v881, %v881
          %v914 = vpack.c.b16 %v882, %v882
          %v915 = vpack.c.b16 %v883, %v883
          %v916 = vpack.c.b16 %v884, %v884
          %v917 = vpack.c.b16 %v885, %v885
          %v918 = vpack.c.b16 %v886, %v886
          %v919 = vpack.c.b16 %v887, %v887
          %v920 = vpack.c.b16 %v888, %v888
          %v921 = vpack.c.b16 %v889, %v889
          %v922 = vpack.c.b16 %v890, %v890
          %v923 = vpack.c.b16 %v891, %v891
          %v924 = vpack.c.b16 %v892, %v892
          %v925 = vpack.c.b16 %v893, %v893
          %958 = vst [vmem:[%s268] sm:$0xf] %v894
          %959 = vst [vmem:[%s268 + $0x4] sm:$0xf] %v895
          %960 = vst [vmem:[%s268 + $0x8] sm:$0xf] %v896
          %961 = vst [vmem:[%s268 + $0xc] sm:$0xf] %v897
          %962 = vst [vmem:[%s268 + $0x10] sm:$0xf] %v898
          %963 = vst [vmem:[%s268 + $0x14] sm:$0xf] %v899
          %964 = vst [vmem:[%s268 + $0x18] sm:$0xf] %v900
          %965 = vst [vmem:[%s268 + $0x1c] sm:$0xf] %v901
          %966 = vst [vmem:[%s268 + $0x20] sm:$0xf] %v902
          %967 = vst [vmem:[%s268 + $0x24] sm:$0xf] %v903
          %968 = vst [vmem:[%s268 + $0x28] sm:$0xf] %v904
          %969 = vst [vmem:[%s268 + $0x2c] sm:$0xf] %v905
          %970 = vst [vmem:[%s268 + $0x30] sm:$0xf] %v906
          %971 = vst [vmem:[%s268 + $0x34] sm:$0xf] %v907
          %972 = vst [vmem:[%s268 + $0x38] sm:$0xf] %v908
          %973 = vst [vmem:[%s268 + $0x3c] sm:$0xf] %v909
          %974 = vst [vmem:[%s268 + $0x40] sm:$0xf] %v910
          %975 = vst [vmem:[%s268 + $0x44] sm:$0xf] %v911
          %976 = vst [vmem:[%s268 + $0x48] sm:$0xf] %v912
          %977 = vst [vmem:[%s268 + $0x4c] sm:$0xf] %v913
          %978 = vst [vmem:[%s268 + $0x50] sm:$0xf] %v914
          %979 = vst [vmem:[%s268 + $0x54] sm:$0xf] %v915
          %980 = vst [vmem:[%s268 + $0x58] sm:$0xf] %v916
          %981 = vst [vmem:[%s268 + $0x5c] sm:$0xf] %v917
          %982 = vst [vmem:[%s268 + $0x60] sm:$0xf] %v918
          %983 = vst [vmem:[%s268 + $0x64] sm:$0xf] %v919
          %984 = vst [vmem:[%s268 + $0x68] sm:$0xf] %v920
          %985 = vst [vmem:[%s268 + $0x6c] sm:$0xf] %v921
          %986 = vst [vmem:[%s268 + $0x70] sm:$0xf] %v922
          %987 = vst [vmem:[%s268 + $0x74] sm:$0xf] %v923
          %988 = vst [vmem:[%s268 + $0x78] sm:$0xf] %v924
          %989 = vst [vmem:[%s268 + $0x7c] sm:$0xf] %v925
        $region44: #{tpu_custom_call.1} parent=31 // pred_fallthru
          _
        %s990 = smul.u32 32, %s22
        %p991 = scmp.lt.s32.totalorder %s990, 63
        %s992 = scalar_select %p991, %s990, 63
        %p993 = scmp.lt.s32.totalorder %s23, 0
        %s994 = scalar_select %p993, %s23, 0
        %s995 = sadd.s32 %s994, %s992
        %s996 = smul.addr %s995, 4
        %s997 = scalar_lea.vmem %s3, %s996
        // Predicated region
        $region45: #{tpu_custom_call.1} parent=31 // pred_check
          %p998 = pneg %p138
        $region46: #{tpu_custom_call.1} parent=31 // pred_check_branch
          %1000 = sbr.rel (%p998) target = $region48
        $region47: #{tpu_custom_call.1} parent=31 // pred_region
          %s1001 = smul.u32 32, %s22
        $region48: #{tpu_custom_call.1} parent=31 // pred_fallthru
          _
      $region32: #{tpu_custom_call.1} parent=5 // pred_fallthru
        _
      %p1002 = scmp.le.s32.totalorder 2, %s12
      // Predicated region
      $region49: #{tpu_custom_call.1} parent=5 // pred_check
        %p1003 = pneg %p1002
      $region50: #{tpu_custom_call.1} parent=5 // pred_check_branch
        %1005 = sbr.rel (%p1003) target = $region52
      $region51: #{tpu_custom_call.1} parent=5 // pred_region
        %s1006 = ssub.s32 %s12, 2
        // Predicated region
        $region53: #{tpu_custom_call.1} parent=51 // pred_check
          %p1007 = pneg %p144
        $region54: #{tpu_custom_call.1} parent=51 // pred_check_branch
          %1009 = sbr.rel (%p1007) target = $region56
        $region55: #{tpu_custom_call.1} parent=51 // pred_region
          %s1010 = smul.u32 32, %s25
          %p1011 = scmp.lt.s32.totalorder %s1010, 63
          %s1012 = scalar_select %p1011, %s1010, 63
          %p1013 = scmp.lt.s32.totalorder %s26, 0
          %s1014 = scalar_select %p1013, %s26, 0
          %s1015 = sadd.s32 %s1014, %s1012
          %s1016 = smul.addr %s1015, 4
          %s1017 = scalar_lea.vmem %s3, %s1016
        $region56: #{tpu_custom_call.1} parent=51 // pred_fallthru
          _
      $region52: #{tpu_custom_call.1} parent=5 // pred_fallthru
        _
    $region6: #{tpu_custom_call.1} parent=1 // loop_footer
      %s16 = sadd.s32 1, %s12
    $region7: #{tpu_custom_call.1} parent=1 // loop_footer_branch
      %11 = sbr.rel target = $region3
    $region8: #{tpu_custom_call.1} parent=1 // loop_exit
      _
    %1018 = vsyncpa [#allocation4], 1
    %s1019 = scalar_lea.sflag [#allocation4], 1
    %1020 = vsyncpa %s1019, 1

</llo_original>
